<compile_context>
chip_gen: v6e
topology: v6e:2x2x1
jax: 0.10.0
libtpu: 0.0.40
codegen_flags: <defaults>
</compile_context>

<pallas_src>
import functools

import jax
import jax.numpy as jnp
from jax.experimental import pallas as pl
from jax.experimental.pallas import tpu as pltpu

OUT_PAD = 128  # lane-dense padded output width


def gnn_kernel(a_ref, p_ref, x_ref,
               w1_ref, b1_ref, w2_ref, b2_ref, w3_ref, b3_ref,
               fw1_ref, fb1_ref, fw2_ref, fb2_ref,
               out_ref):
    a = a_ref[...]          # [N, N] normalized adjacency (bf16, self-loops)
    h = x_ref[...]          # [N, F_in] bf16

    def gcn(h_bf16, w_ref, b_ref):
        # GCNConv: relu( A_hat @ (H @ W) + b ), bf16 MXU inputs, f32 accum.
        hw = jnp.dot(h_bf16, w_ref[...],
                     preferred_element_type=jnp.float32)
        agg = jnp.dot(a, hw.astype(jnp.bfloat16),
                      preferred_element_type=jnp.float32)
        return jnp.maximum(agg + b_ref[...], 0.0).astype(jnp.bfloat16)

    h = gcn(h, w1_ref, b1_ref)          # relu(conv1)
    h = gcn(h, w2_ref, b2_ref)          # relu(conv2)
    h = gcn(h, w3_ref, b3_ref)          # relu(conv3)

    # global_mean_pool as a matmul with the precomputed per-graph mean matrix.
    g = jnp.dot(p_ref[...], h, preferred_element_type=jnp.float32)  # [G, H]

    f = jnp.maximum(
        jnp.dot(g.astype(jnp.bfloat16), fw1_ref[...],
                preferred_element_type=jnp.float32) + fb1_ref[...], 0.0)
    out_ref[...] = (jnp.dot(f.astype(jnp.bfloat16), fw2_ref[...],
                            preferred_element_type=jnp.float32)
                    + fb2_ref[...])     # fc2, lane-dense [G, OUT_PAD]


@functools.partial(jax.jit, static_argnames=("num_graphs",))
def gripping_point_gnn(x, edge_index, batch, params, *, num_graphs):
    """Forward pass matching the PyTorch module's semantics.

    x:          [N, input_dim] float32 node features (all graphs concatenated)
    edge_index: [2, E] int32 (src row 0, dst row 1)
    batch:      [N] int32 graph id per node (0..num_graphs-1)
    num_graphs: static number of graphs in the batch
    """
    x = x.astype(jnp.float32)
    N = x.shape[0]
    H = params["w1"].shape[1]
    F = x.shape[1]
    G = num_graphs
    output_dim = params["fc2_w"].shape[1]

    # Dense adjacency + self loops, symmetric GCN normalization.
    # .add keeps parallel-edge multiplicity (PyG GCNConv semantics).
    src, dst = edge_index[0], edge_index[1]
    A = jnp.zeros((N, N), jnp.float32).at[dst, src].add(1.0)
    A = A + jnp.eye(N, dtype=jnp.float32)
    d_inv_sqrt = jax.lax.rsqrt(A.sum(axis=1))
    A_hat = (A * d_inv_sqrt[:, None] * d_inv_sqrt[None, :]).astype(jnp.bfloat16)

    # Mean-pooling matrix: P[g, n] = 1/|graph g| if node n in graph g else 0.
    onehot = (batch[None, :] == jnp.arange(G)[:, None]).astype(jnp.float32)
    counts = jnp.maximum(onehot.sum(axis=1, keepdims=True), 1.0)
    P = (onehot / counts).astype(jnp.bfloat16)

    # Pad fc2 to a lane-dense (128-wide) output slab; slice after the kernel.
    fc2_w = jnp.zeros((H, OUT_PAD), jnp.float32).at[:, :output_dim].set(
        params["fc2_w"])
    fc2_b = jnp.zeros((1, OUT_PAD), jnp.float32).at[:, :output_dim].set(
        params["fc2_b"].reshape(1, -1))

    flat = (
        params["w1"].astype(jnp.bfloat16), params["b1"].reshape(1, -1),
        params["w2"].astype(jnp.bfloat16), params["b2"].reshape(1, -1),
        params["w3"].astype(jnp.bfloat16), params["b3"].reshape(1, -1),
        params["fc1_w"].astype(jnp.bfloat16), params["fc1_b"].reshape(1, -1),
        fc2_w.astype(jnp.bfloat16), fc2_b,
    )
    x_bf = x.astype(jnp.bfloat16)

    # Advisory cost estimate for XLA scheduling around the custom call.
    flops = ((2 * N * F * H + 2 * N * N * H)            # conv1
             + 2 * (2 * N * H * H + 2 * N * N * H)      # conv2, conv3
             + 2 * G * N * H                            # mean pool
             + 2 * G * H * H                            # fc1
             + 2 * G * H * OUT_PAD)                     # fc2 (padded)
    ins = (A_hat, P, x_bf) + flat
    bytes_accessed = (sum(int(a.size) * a.dtype.itemsize for a in ins)
                      + G * OUT_PAD * 4)
    cost = pl.CostEstimate(flops=int(flops), transcendentals=0,
                           bytes_accessed=int(bytes_accessed))

    n_in = len(ins)
    out_padded = pl.pallas_call(
        gnn_kernel,
        out_shape=jax.ShapeDtypeStruct((G, OUT_PAD), jnp.float32),
        in_specs=[pl.BlockSpec(memory_space=pltpu.MemorySpace.VMEM)] * n_in,
        out_specs=pl.BlockSpec(memory_space=pltpu.MemorySpace.VMEM),
        cost_estimate=cost,
    )(*ins)
    return out_padded[:, :output_dim]


def init_params(key, input_dim, hidden_dim, output_dim):
    ks = jax.random.split(key, 10)

    def w(k, shape):
        fan_in = shape[0]
        return jax.random.normal(k, shape, jnp.float32) / jnp.sqrt(fan_in)

    return {
        "w1": w(ks[0], (input_dim, hidden_dim)),
        "b1": jax.random.normal(ks[1], (hidden_dim,), jnp.float32) * 0.01,
        "w2": w(ks[2], (hidden_dim, hidden_dim)),
        "b2": jax.random.normal(ks[3], (hidden_dim,), jnp.float32) * 0.01,
        "w3": w(ks[4], (hidden_dim, hidden_dim)),
        "b3": jax.random.normal(ks[5], (hidden_dim,), jnp.float32) * 0.01,
        "fc1_w": w(ks[6], (hidden_dim, hidden_dim)),
        "fc1_b": jax.random.normal(ks[7], (hidden_dim,), jnp.float32) * 0.01,
        "fc2_w": w(ks[8], (hidden_dim, output_dim)),
        "fc2_b": jax.random.normal(ks[9], (output_dim,), jnp.float32) * 0.01,
    }


if __name__ == "__main__":
    key = jax.random.PRNGKey(0)
    k_x, k_p = jax.random.split(key)

    nodes_per_graph = 8    # rows of the shape table in the original script
    num_graphs = 16        # batch many ring graphs per pallas_call
    input_dim = 4          # per-node feature dim
    hidden_dim = 32
    output_dim = 2

    N = nodes_per_graph * num_graphs

    # Node features (stand-in for the excel-derived shape table), all graphs
    # concatenated along the node axis.
    x = jax.random.normal(k_x, (N, input_dim), jnp.float32)

    # Ring-graph edge_index per graph, exactly like the original construction
    # ([[i, i+1 mod n]] + [[i+1 mod n, i]]), offset per graph and concatenated.
    edges = []
    for g in range(num_graphs):
        off = g * nodes_per_graph
        for i in range(nodes_per_graph):
            j = (i + 1) % nodes_per_graph
            edges.append([off + i, off + j])
            edges.append([off + j, off + i])
    edge_index = jnp.array(edges, dtype=jnp.int32).T   # [2, E]

    # Graph id per node.
    batch = jnp.repeat(jnp.arange(num_graphs, dtype=jnp.int32),
                       nodes_per_graph)

    params = init_params(k_p, input_dim, hidden_dim, output_dim)

    out = gripping_point_gnn(x, edge_index, batch, params,
                             num_graphs=num_graphs)
    jax.block_until_ready(out)
    assert out.shape == (num_graphs, output_dim)
    print("KERNEL_OK")
</pallas_src>

<mosaic_0001>
module attributes {stable_mosaic.version = 11 : i64} {
  func.func private @main(%arg0: i32) attributes {dimension_semantics = [#tpu.dimension_semantics<core_parallel>], iteration_bounds = array<i64: 2>, tpu.core_type = #tpu.core_type<sc_scalar_subcore>, window_params = []} {
    return
  }
}

module attributes {stable_mosaic.version = 11 : i64} {
  func.func private @main(%arg0: i32) attributes {dimension_semantics = [#tpu.dimension_semantics<core_parallel>], iteration_bounds = array<i64: 2>, tpu.core_type = #tpu.core_type<sc_scalar_subcore>, window_params = []} {
    return
  }
}

module attributes {stable_mosaic.version = 11 : i64} {
  func.func @gnn_kernel(%arg0: memref<128x128xbf16, #tpu.memory_space<vmem>>, %arg1: memref<16x128xbf16, #tpu.memory_space<vmem>>, %arg2: memref<128x4xbf16, #tpu.memory_space<vmem>>, %arg3: memref<4x32xbf16, #tpu.memory_space<vmem>>, %arg4: memref<1x32xf32, #tpu.memory_space<vmem>>, %arg5: memref<32x32xbf16, #tpu.memory_space<vmem>>, %arg6: memref<1x32xf32, #tpu.memory_space<vmem>>, %arg7: memref<32x32xbf16, #tpu.memory_space<vmem>>, %arg8: memref<1x32xf32, #tpu.memory_space<vmem>>, %arg9: memref<32x32xbf16, #tpu.memory_space<vmem>>, %arg10: memref<1x32xf32, #tpu.memory_space<vmem>>, %arg11: memref<32x128xbf16, #tpu.memory_space<vmem>>, %arg12: memref<1x128xf32, #tpu.memory_space<vmem>>, %arg13: memref<16x128xf32, #tpu.memory_space<vmem>>) attributes {dimension_semantics = [], scalar_prefetch = 0 : i64, scratch_operands = 0 : i64, tpu.core_type = #tpu.core_type<tc>} {
    %c0 = arith.constant 0 : index
    %c0_0 = arith.constant 0 : index
    %0 = vector.load %arg0[%c0, %c0_0] : memref<128x128xbf16, #tpu.memory_space<vmem>>, vector<128x128xbf16>
    %c0_1 = arith.constant 0 : index
    %c0_2 = arith.constant 0 : index
    %1 = vector.load %arg2[%c0_1, %c0_2] : memref<128x4xbf16, #tpu.memory_space<vmem>>, vector<128x4xbf16>
    %c0_3 = arith.constant 0 : index
    %c0_4 = arith.constant 0 : index
    %2 = vector.load %arg3[%c0_3, %c0_4] : memref<4x32xbf16, #tpu.memory_space<vmem>>, vector<4x32xbf16>
    %cst = arith.constant dense<0.000000e+00> : vector<128x32xf32>
    %3 = tpu.matmul %1, %2, %cst {dimension_numbers = #tpu.dot_dimension_numbers<[1], [0], [0], [1], [0, 0, 1, 1], [], []>} : vector<128x4xbf16>, vector<4x32xbf16>, vector<128x32xf32> -> vector<128x32xf32>
    %4 = arith.truncf %3 : vector<128x32xf32> to vector<128x32xbf16>
    %cst_5 = arith.constant dense<0.000000e+00> : vector<128x32xf32>
    %5 = tpu.matmul %0, %4, %cst_5 {dimension_numbers = #tpu.dot_dimension_numbers<[1], [0], [0], [1], [0, 0, 1, 1], [], []>} : vector<128x128xbf16>, vector<128x32xbf16>, vector<128x32xf32> -> vector<128x32xf32>
    %c0_6 = arith.constant 0 : index
    %c0_7 = arith.constant 0 : index
    %6 = vector.load %arg4[%c0_6, %c0_7] : memref<1x32xf32, #tpu.memory_space<vmem>>, vector<1x32xf32>
    %7 = vector.broadcast %6 : vector<1x32xf32> to vector<128x32xf32>
    %8 = arith.addf %5, %7 : vector<128x32xf32>
    %cst_8 = arith.constant 0.000000e+00 : f32
    %9 = vector.broadcast %cst_8 : f32 to vector<128x32xf32>
    %10 = arith.maximumf %8, %9 : vector<128x32xf32>
    %11 = arith.truncf %10 : vector<128x32xf32> to vector<128x32xbf16>
    %c0_9 = arith.constant 0 : index
    %c0_10 = arith.constant 0 : index
    %12 = vector.load %arg5[%c0_9, %c0_10] : memref<32x32xbf16, #tpu.memory_space<vmem>>, vector<32x32xbf16>
    %cst_11 = arith.constant dense<0.000000e+00> : vector<128x32xf32>
    %13 = tpu.matmul %11, %12, %cst_11 {dimension_numbers = #tpu.dot_dimension_numbers<[1], [0], [0], [1], [0, 0, 1, 1], [], []>} : vector<128x32xbf16>, vector<32x32xbf16>, vector<128x32xf32> -> vector<128x32xf32>
    %14 = arith.truncf %13 : vector<128x32xf32> to vector<128x32xbf16>
    %cst_12 = arith.constant dense<0.000000e+00> : vector<128x32xf32>
    %15 = tpu.matmul %0, %14, %cst_12 {dimension_numbers = #tpu.dot_dimension_numbers<[1], [0], [0], [1], [0, 0, 1, 1], [], []>} : vector<128x128xbf16>, vector<128x32xbf16>, vector<128x32xf32> -> vector<128x32xf32>
    %c0_13 = arith.constant 0 : index
    %c0_14 = arith.constant 0 : index
    %16 = vector.load %arg6[%c0_13, %c0_14] : memref<1x32xf32, #tpu.memory_space<vmem>>, vector<1x32xf32>
    %17 = vector.broadcast %16 : vector<1x32xf32> to vector<128x32xf32>
    %18 = arith.addf %15, %17 : vector<128x32xf32>
    %cst_15 = arith.constant 0.000000e+00 : f32
    %19 = vector.broadcast %cst_15 : f32 to vector<128x32xf32>
    %20 = arith.maximumf %18, %19 : vector<128x32xf32>
    %21 = arith.truncf %20 : vector<128x32xf32> to vector<128x32xbf16>
    %c0_16 = arith.constant 0 : index
    %c0_17 = arith.constant 0 : index
    %22 = vector.load %arg7[%c0_16, %c0_17] : memref<32x32xbf16, #tpu.memory_space<vmem>>, vector<32x32xbf16>
    %cst_18 = arith.constant dense<0.000000e+00> : vector<128x32xf32>
    %23 = tpu.matmul %21, %22, %cst_18 {dimension_numbers = #tpu.dot_dimension_numbers<[1], [0], [0], [1], [0, 0, 1, 1], [], []>} : vector<128x32xbf16>, vector<32x32xbf16>, vector<128x32xf32> -> vector<128x32xf32>
    %24 = arith.truncf %23 : vector<128x32xf32> to vector<128x32xbf16>
    %cst_19 = arith.constant dense<0.000000e+00> : vector<128x32xf32>
    %25 = tpu.matmul %0, %24, %cst_19 {dimension_numbers = #tpu.dot_dimension_numbers<[1], [0], [0], [1], [0, 0, 1, 1], [], []>} : vector<128x128xbf16>, vector<128x32xbf16>, vector<128x32xf32> -> vector<128x32xf32>
    %c0_20 = arith.constant 0 : index
    %c0_21 = arith.constant 0 : index
    %26 = vector.load %arg8[%c0_20, %c0_21] : memref<1x32xf32, #tpu.memory_space<vmem>>, vector<1x32xf32>
    %27 = vector.broadcast %26 : vector<1x32xf32> to vector<128x32xf32>
    %28 = arith.addf %25, %27 : vector<128x32xf32>
    %cst_22 = arith.constant 0.000000e+00 : f32
    %29 = vector.broadcast %cst_22 : f32 to vector<128x32xf32>
    %30 = arith.maximumf %28, %29 : vector<128x32xf32>
    %31 = arith.truncf %30 : vector<128x32xf32> to vector<128x32xbf16>
    %c0_23 = arith.constant 0 : index
    %c0_24 = arith.constant 0 : index
    %32 = vector.load %arg1[%c0_23, %c0_24] : memref<16x128xbf16, #tpu.memory_space<vmem>>, vector<16x128xbf16>
    %cst_25 = arith.constant dense<0.000000e+00> : vector<16x32xf32>
    %33 = tpu.matmul %32, %31, %cst_25 {dimension_numbers = #tpu.dot_dimension_numbers<[1], [0], [0], [1], [0, 0, 1, 1], [], []>} : vector<16x128xbf16>, vector<128x32xbf16>, vector<16x32xf32> -> vector<16x32xf32>
    %34 = arith.truncf %33 : vector<16x32xf32> to vector<16x32xbf16>
    %c0_26 = arith.constant 0 : index
    %c0_27 = arith.constant 0 : index
    %35 = vector.load %arg9[%c0_26, %c0_27] : memref<32x32xbf16, #tpu.memory_space<vmem>>, vector<32x32xbf16>
    %cst_28 = arith.constant dense<0.000000e+00> : vector<16x32xf32>
    %36 = tpu.matmul %34, %35, %cst_28 {dimension_numbers = #tpu.dot_dimension_numbers<[1], [0], [0], [1], [0, 0, 1, 1], [], []>} : vector<16x32xbf16>, vector<32x32xbf16>, vector<16x32xf32> -> vector<16x32xf32>
    %c0_29 = arith.constant 0 : index
    %c0_30 = arith.constant 0 : index
    %37 = vector.load %arg10[%c0_29, %c0_30] : memref<1x32xf32, #tpu.memory_space<vmem>>, vector<1x32xf32>
    %38 = vector.broadcast %37 : vector<1x32xf32> to vector<16x32xf32>
    %39 = arith.addf %36, %38 : vector<16x32xf32>
    %cst_31 = arith.constant 0.000000e+00 : f32
    %40 = vector.broadcast %cst_31 : f32 to vector<16x32xf32>
    %41 = arith.maximumf %39, %40 : vector<16x32xf32>
    %42 = arith.truncf %41 : vector<16x32xf32> to vector<16x32xbf16>
    %c0_32 = arith.constant 0 : index
    %c0_33 = arith.constant 0 : index
    %43 = vector.load %arg11[%c0_32, %c0_33] : memref<32x128xbf16, #tpu.memory_space<vmem>>, vector<32x128xbf16>
    %cst_34 = arith.constant dense<0.000000e+00> : vector<16x128xf32>
    %44 = tpu.matmul %42, %43, %cst_34 {dimension_numbers = #tpu.dot_dimension_numbers<[1], [0], [0], [1], [0, 0, 1, 1], [], []>} : vector<16x32xbf16>, vector<32x128xbf16>, vector<16x128xf32> -> vector<16x128xf32>
    %c0_35 = arith.constant 0 : index
    %c0_36 = arith.constant 0 : index
    %45 = vector.load %arg12[%c0_35, %c0_36] : memref<1x128xf32, #tpu.memory_space<vmem>>, vector<1x128xf32>
    %46 = vector.broadcast %45 : vector<1x128xf32> to vector<16x128xf32>
    %47 = arith.addf %44, %46 : vector<16x128xf32>
    %c0_37 = arith.constant 0 : index
    %c0_38 = arith.constant 0 : index
    %48 = vector.load %arg13[%c0_37, %c0_38] : memref<16x128xf32, #tpu.memory_space<vmem>>, vector<16x128xf32>
    tpu.vector_store %arg13[%c0_37, %c0_38], %47 {strides = array<i32>} : memref<16x128xf32, #tpu.memory_space<vmem>>, vector<16x128xf32>,
    return
  }
}

</mosaic_0001>

<llo_original>
// kernel: gripping_point_gnn.1
$region0: #{gripping_point_gnn.1}
  #allocation0 [shape = 'u32[]', space=smem, size = 0x4, offset = 0x4, fixed_abs, tag = 'smem constant byte address 0x4 - core index']
  #allocation1 [shape = 'u32[144,128]{1,0:T(1,128)}', space=vmem, size = 0x12000, scoped, tag = 'internal scratch']
  %s0 = inlined_call_operand.vmem [shape: bf16[128,128], index: 0, kind: input, shape index: {}]
  %s1 = inlined_call_operand.vmem [shape: bf16[16,128], index: 1, kind: input, shape index: {}]
  %s2 = inlined_call_operand.vmem [shape: bf16[128,4], index: 2, kind: input, shape index: {}]
  %s3 = inlined_call_operand.vmem [shape: bf16[4,32], index: 3, kind: input, shape index: {}]
  %s4 = inlined_call_operand.vmem [shape: f32[1,32], index: 4, kind: input, shape index: {}]
  %s5 = inlined_call_operand.vmem [shape: bf16[32,32], index: 5, kind: input, shape index: {}]
  %s6 = inlined_call_operand.vmem [shape: f32[1,32], index: 6, kind: input, shape index: {}]
  %s7 = inlined_call_operand.vmem [shape: bf16[32,32], index: 7, kind: input, shape index: {}]
  %s8 = inlined_call_operand.vmem [shape: f32[1,32], index: 8, kind: input, shape index: {}]
  %s9 = inlined_call_operand.vmem [shape: bf16[32,32], index: 9, kind: input, shape index: {}]
  %s10 = inlined_call_operand.vmem [shape: f32[1,32], index: 10, kind: input, shape index: {}]
  %s11 = inlined_call_operand.vmem [shape: bf16[32,128], index: 11, kind: input, shape index: {}]
  %s12 = inlined_call_operand.vmem [shape: f32[1,128], index: 12, kind: input, shape index: {}]
  %s13 = inlined_call_operand.vmem [shape: f32[16,128], index: 13, kind: output, shape index: {}]
  %s14 = sld [smem:[#allocation0]]
  $region62: #{gripping_point_gnn.1} parent=0
    _
  %s16 = ssub.s32 1, %s14
  %s17 = scalar_select 0, %s16, %s14
  // Predicated region
  $region2: #{gripping_point_gnn.1} parent=0 // pred_check
    _
  $region3: #{gripping_point_gnn.1} parent=0 // pred_check_branch
    %19 = sbr.rel (0) target = $region5
  $region4: #{gripping_point_gnn.1} parent=0 // pred_region
    _
  $region5: #{gripping_point_gnn.1} parent=0 // pred_fallthru
    _
  // Predicated region
  $region6: #{gripping_point_gnn.1} parent=0 // pred_check
    _
  $region7: #{gripping_point_gnn.1} parent=0 // pred_check_branch
    %21 = sbr.rel (0) target = $region9
  $region8: #{gripping_point_gnn.1} parent=0 // pred_region
    _
  $region9: #{gripping_point_gnn.1} parent=0 // pred_fallthru
    _
  // Predicated region
  $region10: #{gripping_point_gnn.1} parent=0 // pred_check
    _
  $region11: #{gripping_point_gnn.1} parent=0 // pred_check_branch
    %23 = sbr.rel (0) target = $region13
  $region12: #{gripping_point_gnn.1} parent=0 // pred_region
    _
  $region13: #{gripping_point_gnn.1} parent=0 // pred_fallthru
    _
  // Predicated region
  $region14: #{gripping_point_gnn.1} parent=0 // pred_check
    _
  $region15: #{gripping_point_gnn.1} parent=0 // pred_check_branch
    %25 = sbr.rel (0) target = $region17
  $region16: #{gripping_point_gnn.1} parent=0 // pred_region
    _
  $region17: #{gripping_point_gnn.1} parent=0 // pred_fallthru
    _
  // Predicated region
  $region18: #{gripping_point_gnn.1} parent=0 // pred_check
    _
  $region19: #{gripping_point_gnn.1} parent=0 // pred_check_branch
    %27 = sbr.rel (0) target = $region21
  $region20: #{gripping_point_gnn.1} parent=0 // pred_region
    _
  $region21: #{gripping_point_gnn.1} parent=0 // pred_fallthru
    _
  // Predicated region
  $region22: #{gripping_point_gnn.1} parent=0 // pred_check
    _
  $region23: #{gripping_point_gnn.1} parent=0 // pred_check_branch
    %29 = sbr.rel (0) target = $region25
  $region24: #{gripping_point_gnn.1} parent=0 // pred_region
    _
  $region25: #{gripping_point_gnn.1} parent=0 // pred_fallthru
    _
  // Predicated region
  $region26: #{gripping_point_gnn.1} parent=0 // pred_check
    _
  $region27: #{gripping_point_gnn.1} parent=0 // pred_check_branch
    %31 = sbr.rel (0) target = $region29
  $region28: #{gripping_point_gnn.1} parent=0 // pred_region
    _
  $region29: #{gripping_point_gnn.1} parent=0 // pred_fallthru
    _
  // Predicated region
  $region30: #{gripping_point_gnn.1} parent=0 // pred_check
    _
  $region31: #{gripping_point_gnn.1} parent=0 // pred_check_branch
    %33 = sbr.rel (0) target = $region33
  $region32: #{gripping_point_gnn.1} parent=0 // pred_region
    _
  $region33: #{gripping_point_gnn.1} parent=0 // pred_fallthru
    _
  // Predicated region
  $region34: #{gripping_point_gnn.1} parent=0 // pred_check
    _
  $region35: #{gripping_point_gnn.1} parent=0 // pred_check_branch
    %35 = sbr.rel (0) target = $region37
  $region36: #{gripping_point_gnn.1} parent=0 // pred_region
    _
  $region37: #{gripping_point_gnn.1} parent=0 // pred_fallthru
    _
  // Predicated region
  $region38: #{gripping_point_gnn.1} parent=0 // pred_check
    _
  $region39: #{gripping_point_gnn.1} parent=0 // pred_check_branch
    %37 = sbr.rel (0) target = $region41
  $region40: #{gripping_point_gnn.1} parent=0 // pred_region
    _
  $region41: #{gripping_point_gnn.1} parent=0 // pred_fallthru
    _
  // Predicated region
  $region42: #{gripping_point_gnn.1} parent=0 // pred_check
    _
  $region43: #{gripping_point_gnn.1} parent=0 // pred_check_branch
    %39 = sbr.rel (0) target = $region45
  $region44: #{gripping_point_gnn.1} parent=0 // pred_region
    _
  $region45: #{gripping_point_gnn.1} parent=0 // pred_fallthru
    _
  // Predicated region
  $region46: #{gripping_point_gnn.1} parent=0 // pred_check
    _
  $region47: #{gripping_point_gnn.1} parent=0 // pred_check_branch
    %41 = sbr.rel (0) target = $region49
  $region48: #{gripping_point_gnn.1} parent=0 // pred_region
    _
  $region49: #{gripping_point_gnn.1} parent=0 // pred_fallthru
    _
  // Predicated region
  $region50: #{gripping_point_gnn.1} parent=0 // pred_check
    _
  $region51: #{gripping_point_gnn.1} parent=0 // pred_check_branch
    %43 = sbr.rel (0) target = $region53
  $region52: #{gripping_point_gnn.1} parent=0 // pred_region
    _
  $region53: #{gripping_point_gnn.1} parent=0 // pred_fallthru
    _
  %v45 = vld [vmem:[%s0] sm:$0xf]
  %v46 = vld [vmem:[%s0 + $0x4] sm:$0xf]
  %v47 = vld [vmem:[%s0 + $0x8] sm:$0xf]
  %v48 = vld [vmem:[%s0 + $0xc] sm:$0xf]
  %v49 = vld [vmem:[%s0 + $0x10] sm:$0xf]
  %v50 = vld [vmem:[%s0 + $0x14] sm:$0xf]
  %v51 = vld [vmem:[%s0 + $0x18] sm:$0xf]
  %v52 = vld [vmem:[%s0 + $0x1c] sm:$0xf]
  %v53 = vld [vmem:[%s0 + $0x20] sm:$0xf]
  %v54 = vld [vmem:[%s0 + $0x24] sm:$0xf]
  %v55 = vld [vmem:[%s0 + $0x28] sm:$0xf]
  %v56 = vld [vmem:[%s0 + $0x2c] sm:$0xf]
  %v57 = vld [vmem:[%s0 + $0x30] sm:$0xf]
  %v58 = vld [vmem:[%s0 + $0x34] sm:$0xf]
  %v59 = vld [vmem:[%s0 + $0x38] sm:$0xf]
  %v60 = vld [vmem:[%s0 + $0x3c] sm:$0xf]
  %v61 = vld [vmem:[%s2] sm:$0xf]
  %v62 = vld [vmem:[%s2 + $0x4] sm:$0xf]
  %v63 = vld [vmem:[%s2 + $0x8] sm:$0xf]
  %v64 = vld [vmem:[%s2 + $0xc] sm:$0xf]
  %v65 = vld [vmem:[%s2 + $0x10] sm:$0xf]
  %v66 = vld [vmem:[%s2 + $0x14] sm:$0xf]
  %v67 = vld [vmem:[%s2 + $0x18] sm:$0xf]
  %v68 = vld [vmem:[%s2 + $0x1c] sm:$0xf]
  %v69 = vld [vmem:[%s2 + $0x20] sm:$0xf]
  %v70 = vld [vmem:[%s2 + $0x24] sm:$0xf]
  %v71 = vld [vmem:[%s2 + $0x28] sm:$0xf]
  %v72 = vld [vmem:[%s2 + $0x2c] sm:$0xf]
  %v73 = vld [vmem:[%s2 + $0x30] sm:$0xf]
  %v74 = vld [vmem:[%s2 + $0x34] sm:$0xf]
  %v75 = vld [vmem:[%s2 + $0x38] sm:$0xf]
  %v76 = vld [vmem:[%s2 + $0x3c] sm:$0xf]
  %v77 = vld [vmem:[%s3] sm:$0x3]
  %v94 = vunpack.c.l.b16 %v61
  %v95 = vunpack.c.l.b16 %v62
  %v96 = vunpack.c.l.b16 %v63
  %v97 = vunpack.c.l.b16 %v64
  %v98 = vunpack.c.l.b16 %v65
  %v99 = vunpack.c.l.b16 %v66
  %v100 = vunpack.c.l.b16 %v67
  %v101 = vunpack.c.l.b16 %v68
  %v102 = vunpack.c.l.b16 %v69
  %v103 = vunpack.c.l.b16 %v70
  %v104 = vunpack.c.l.b16 %v71
  %v105 = vunpack.c.l.b16 %v72
  %v106 = vunpack.c.l.b16 %v73
  %v107 = vunpack.c.l.b16 %v74
  %v108 = vunpack.c.l.b16 %v75
  %v109 = vunpack.c.l.b16 %v76
  %v110 = vpack.c.b16 %v95, %v94
  %v111 = vpack.c.b16 %v97, %v96
  %v112 = vpack.c.b16 %v99, %v98
  %v113 = vpack.c.b16 %v101, %v100
  %v114 = vpack.c.b16 %v103, %v102
  %v115 = vpack.c.b16 %v105, %v104
  %v116 = vpack.c.b16 %v107, %v106
  %v117 = vpack.c.b16 %v109, %v108
  %vm118 = vcmask 31744
  %v120 = vsel %vm118, %v110, 0
  %v123 = vsel %vm118, %v111, 0
  %v126 = vsel %vm118, %v112, 0
  %v129 = vsel %vm118, %v113, 0
  %v132 = vsel %vm118, %v114, 0
  %v135 = vsel %vm118, %v115, 0
  %v138 = vsel %vm118, %v116, 0
  %v141 = vsel %vm118, %v117, 0
  %vm143 = vcmask 1041408
  %v145 = vsel %vm143, %v77, 0
  %147 = vmatprep.subr.bf16.mxu0 0
  %148 = vmatpush1.bf16.msra.mxu0 0
  %149 = vmatprep.subr.bf16.mxu0 0
  %150 = vmatpush1.bf16.msra.mxu0 0
  %151 = vmatprep.subr.bf16.mxu0 0
  %152 = vmatpush1.bf16.msra.mxu0 0
  %153 = vmatprep.subr.bf16.mxu0 0
  %154 = vmatpush1.bf16.msra.mxu0 0
  %155 = vmatprep.subr.bf16.mxu0 0
  %156 = vmatpush1.bf16.msra.mxu0 0
  %157 = vmatprep.subr.bf16.mxu0 0
  %158 = vmatpush1.bf16.msra.mxu0 0
  %159 = vmatprep.subr.bf16.mxu0 0
  %160 = vmatpush1.bf16.msra.mxu0 0
  %161 = vmatprep.subr.bf16.mxu0 0
  %162 = vmatpush1.bf16.msra.mxu0 %v145
  %163 = vmatprep.subr.bf16.mxu0 0
  %164 = vmatpush2.bf16.msra.mxu0 0
  %165 = vmatprep.subr.bf16.mxu0 0
  %166 = vmatpush2.bf16.msra.mxu0 0
  %167 = vmatprep.subr.bf16.mxu0 0
  %168 = vmatpush2.bf16.msra.mxu0 0
  %169 = vmatprep.subr.bf16.mxu0 0
  %170 = vmatpush2.bf16.msra.mxu0 0
  %171 = vmatprep.subr.bf16.mxu0 0
  %172 = vmatpush2.bf16.msra.mxu0 0
  %173 = vmatprep.subr.bf16.mxu0 0
  %174 = vmatpush2.bf16.msra.mxu0 0
  %175 = vmatprep.subr.bf16.mxu0 0
  %176 = vmatpush2.bf16.msra.mxu0 0
  %177 = vmatprep.subr.bf16.mxu0 0
  %178 = vmatpush2.bf16.msra.mxu0 0
  %179 = vmatprep.mubr.bf16.mxu0 0
  %180 = vmatmul.mubr.bf16.gmra.mxu0 %v120
  %v181 = vpop.f32.mrf.mxu0
  %v182 = vadd.f32 0.0, %v181
  %v183 = vpop.f32.mrf.mxu0
  %v184 = vpop.f32.mrf.mxu0
  %v185 = vadd.f32 0.0, %v184
  %v186 = vpop.f32.mrf.mxu0
  %187 = vmatprep.mubr.bf16.mxu0 0
  %188 = vmatmul.mubr.bf16.gmra.mxu0 %v123
  %v189 = vpop.f32.mrf.mxu0
  %v190 = vadd.f32 0.0, %v189
  %v191 = vpop.f32.mrf.mxu0
  %v192 = vpop.f32.mrf.mxu0
  %v193 = vadd.f32 0.0, %v192
  %v194 = vpop.f32.mrf.mxu0
  %195 = vmatprep.mubr.bf16.mxu0 0
  %196 = vmatmul.mubr.bf16.gmra.mxu0 %v126
  %v197 = vpop.f32.mrf.mxu0
  %v198 = vadd.f32 0.0, %v197
  %v199 = vpop.f32.mrf.mxu0
  %v200 = vpop.f32.mrf.mxu0
  %v201 = vadd.f32 0.0, %v200
  %v202 = vpop.f32.mrf.mxu0
  %203 = vmatprep.mubr.bf16.mxu0 0
  %204 = vmatmul.mubr.bf16.gmra.mxu0 %v129
  %v205 = vpop.f32.mrf.mxu0
  %v206 = vadd.f32 0.0, %v205
  %v207 = vpop.f32.mrf.mxu0
  %v208 = vpop.f32.mrf.mxu0
  %v209 = vadd.f32 0.0, %v208
  %v210 = vpop.f32.mrf.mxu0
  %211 = vmatprep.mubr.bf16.mxu0 0
  %212 = vmatmul.mubr.bf16.gmra.mxu0 %v132
  %v213 = vpop.f32.mrf.mxu0
  %v214 = vadd.f32 0.0, %v213
  %v215 = vpop.f32.mrf.mxu0
  %v216 = vpop.f32.mrf.mxu0
  %v217 = vadd.f32 0.0, %v216
  %v218 = vpop.f32.mrf.mxu0
  %219 = vmatprep.mubr.bf16.mxu0 0
  %220 = vmatmul.mubr.bf16.gmra.mxu0 %v135
  %v221 = vpop.f32.mrf.mxu0
  %v222 = vadd.f32 0.0, %v221
  %v223 = vpop.f32.mrf.mxu0
  %v224 = vpop.f32.mrf.mxu0
  %v225 = vadd.f32 0.0, %v224
  %v226 = vpop.f32.mrf.mxu0
  %227 = vmatprep.mubr.bf16.mxu0 0
  %228 = vmatmul.mubr.bf16.gmra.mxu0 %v138
  %v229 = vpop.f32.mrf.mxu0
  %v230 = vadd.f32 0.0, %v229
  %v231 = vpop.f32.mrf.mxu0
  %v232 = vpop.f32.mrf.mxu0
  %v233 = vadd.f32 0.0, %v232
  %v234 = vpop.f32.mrf.mxu0
  %235 = vmatprep.mubr.bf16.mxu0 0
  %236 = vmatmul.mubr.bf16.gmra.mxu0 %v141
  %v237 = vpop.f32.mrf.mxu0
  %v238 = vadd.f32 0.0, %v237
  %v239 = vpop.f32.mrf.mxu0
  %v240 = vpop.f32.mrf.mxu0
  %v241 = vadd.f32 0.0, %v240
  %v242 = vpop.f32.mrf.mxu0
  %243 = vdwg.mxu0
  %v244 = vpack.c.bf16 %v185, %v182
  %v245 = vpack.c.bf16 %v193, %v190
  %v246 = vpack.c.bf16 %v201, %v198
  %v247 = vpack.c.bf16 %v209, %v206
  %v248 = vpack.c.bf16 %v217, %v214
  %v249 = vpack.c.bf16 %v225, %v222
  %v250 = vpack.c.bf16 %v233, %v230
  %v251 = vpack.c.bf16 %v241, %v238
  %v252 = vld [vmem:[%s4] sm:$0x1]
  %v254 = vlaneseq
  %v255 = vshrl.u32 %v254, 7
  %v256 = vsub.s32 0, %v255
  %v257 = vrot.slane %v252, %v256
  %v275 = vunpack.c.l.b16 %v45
  %v276 = vunpack.c.l.b16 %v46
  %v277 = vunpack.c.l.b16 %v47
  %v278 = vunpack.c.l.b16 %v48
  %v279 = vunpack.c.l.b16 %v49
  %v280 = vunpack.c.l.b16 %v50
  %v281 = vunpack.c.l.b16 %v51
  %v282 = vunpack.c.l.b16 %v52
  %v283 = vunpack.c.l.b16 %v53
  %v284 = vunpack.c.l.b16 %v54
  %v285 = vunpack.c.l.b16 %v55
  %v286 = vunpack.c.l.b16 %v56
  %v287 = vunpack.c.l.b16 %v57
  %v288 = vunpack.c.l.b16 %v58
  %v289 = vunpack.c.l.b16 %v59
  %v290 = vunpack.c.l.b16 %v60
  %v291 = vpack.c.b16 %v276, %v275
  %v292 = vpack.c.b16 %v278, %v277
  %v293 = vpack.c.b16 %v280, %v279
  %v294 = vpack.c.b16 %v282, %v281
  %v295 = vpack.c.b16 %v284, %v283
  %v296 = vpack.c.b16 %v286, %v285
  %v297 = vpack.c.b16 %v288, %v287
  %v298 = vpack.c.b16 %v290, %v289
  %307 = vmatprep.subr.bf16.mxu0 0
  %308 = vmatpush1.bf16.msra.mxu0 %v251
  %309 = vmatprep.subr.bf16.mxu0 0
  %310 = vmatpush1.bf16.msra.mxu0 %v250
  %311 = vmatprep.subr.bf16.mxu0 0
  %312 = vmatpush1.bf16.msra.mxu0 %v249
  %313 = vmatprep.subr.bf16.mxu0 0
  %314 = vmatpush1.bf16.msra.mxu0 %v248
  %315 = vmatprep.subr.bf16.mxu0 0
  %316 = vmatpush1.bf16.msra.mxu0 %v247
  %317 = vmatprep.subr.bf16.mxu0 0
  %318 = vmatpush1.bf16.msra.mxu0 %v246
  %319 = vmatprep.subr.bf16.mxu0 0
  %320 = vmatpush1.bf16.msra.mxu0 %v245
  %321 = vmatprep.subr.bf16.mxu0 0
  %322 = vmatpush1.bf16.msra.mxu0 %v244
  %323 = vmatprep.subr.bf16.mxu0 0
  %324 = vmatpush2.bf16.msra.mxu0 0
  %325 = vmatprep.subr.bf16.mxu0 0
  %326 = vmatpush2.bf16.msra.mxu0 0
  %327 = vmatprep.subr.bf16.mxu0 0
  %328 = vmatpush2.bf16.msra.mxu0 0
  %329 = vmatprep.subr.bf16.mxu0 0
  %330 = vmatpush2.bf16.msra.mxu0 0
  %331 = vmatprep.subr.bf16.mxu0 0
  %332 = vmatpush2.bf16.msra.mxu0 0
  %333 = vmatprep.subr.bf16.mxu0 0
  %334 = vmatpush2.bf16.msra.mxu0 0
  %335 = vmatprep.subr.bf16.mxu0 0
  %336 = vmatpush2.bf16.msra.mxu0 0
  %337 = vmatprep.subr.bf16.mxu0 0
  %338 = vmatpush2.bf16.msra.mxu0 0
  %339 = vmatprep.mubr.bf16.mxu0 0
  %340 = vmatmul.mubr.bf16.gmra.mxu0 %v291
  %v341 = vpop.f32.mrf.mxu0
  %v342 = vadd.f32 %v257, %v341
  %v343 = vpop.f32.mrf.mxu0
  %v344 = vpop.f32.mrf.mxu0
  %v345 = vadd.f32 %v257, %v344
  %v346 = vpop.f32.mrf.mxu0
  %347 = vmatprep.mubr.bf16.mxu0 0
  %348 = vmatmul.mubr.bf16.gmra.mxu0 %v292
  %v349 = vpop.f32.mrf.mxu0
  %v350 = vadd.f32 %v257, %v349
  %v351 = vpop.f32.mrf.mxu0
  %v352 = vpop.f32.mrf.mxu0
  %v353 = vadd.f32 %v257, %v352
  %v354 = vpop.f32.mrf.mxu0
  %355 = vmatprep.mubr.bf16.mxu0 0
  %356 = vmatmul.mubr.bf16.gmra.mxu0 %v293
  %v357 = vpop.f32.mrf.mxu0
  %v358 = vadd.f32 %v257, %v357
  %v359 = vpop.f32.mrf.mxu0
  %v360 = vpop.f32.mrf.mxu0
  %v361 = vadd.f32 %v257, %v360
  %v362 = vpop.f32.mrf.mxu0
  %363 = vmatprep.mubr.bf16.mxu0 0
  %364 = vmatmul.mubr.bf16.gmra.mxu0 %v294
  %v365 = vpop.f32.mrf.mxu0
  %v366 = vadd.f32 %v257, %v365
  %v367 = vpop.f32.mrf.mxu0
  %v368 = vpop.f32.mrf.mxu0
  %v369 = vadd.f32 %v257, %v368
  %v370 = vpop.f32.mrf.mxu0
  %371 = vmatprep.mubr.bf16.mxu0 0
  %372 = vmatmul.mubr.bf16.gmra.mxu0 %v295
  %v373 = vpop.f32.mrf.mxu0
  %v374 = vadd.f32 %v257, %v373
  %v375 = vpop.f32.mrf.mxu0
  %v376 = vpop.f32.mrf.mxu0
  %v377 = vadd.f32 %v257, %v376
  %v378 = vpop.f32.mrf.mxu0
  %379 = vmatprep.mubr.bf16.mxu0 0
  %380 = vmatmul.mubr.bf16.gmra.mxu0 %v296
  %v381 = vpop.f32.mrf.mxu0
  %v382 = vadd.f32 %v257, %v381
  %v383 = vpop.f32.mrf.mxu0
  %v384 = vpop.f32.mrf.mxu0
  %v385 = vadd.f32 %v257, %v384
  %v386 = vpop.f32.mrf.mxu0
  %387 = vmatprep.mubr.bf16.mxu0 0
  %388 = vmatmul.mubr.bf16.gmra.mxu0 %v297
  %v389 = vpop.f32.mrf.mxu0
  %v390 = vadd.f32 %v257, %v389
  %v391 = vpop.f32.mrf.mxu0
  %v392 = vpop.f32.mrf.mxu0
  %v393 = vadd.f32 %v257, %v392
  %v394 = vpop.f32.mrf.mxu0
  %395 = vmatprep.mubr.bf16.mxu0 0
  %396 = vmatmul.mubr.bf16.gmra.mxu0 %v298
  %v397 = vpop.f32.mrf.mxu0
  %v398 = vadd.f32 %v257, %v397
  %v399 = vpop.f32.mrf.mxu0
  %v400 = vpop.f32.mrf.mxu0
  %v401 = vadd.f32 %v257, %v400
  %v402 = vpop.f32.mrf.mxu0
  %403 = vdwg.mxu0
  %v404 = vmax.f32 %v342, 0.0
  %v405 = vmax.f32 %v345, 0.0
  %v406 = vmax.f32 %v350, 0.0
  %v407 = vmax.f32 %v353, 0.0
  %v408 = vmax.f32 %v358, 0.0
  %v409 = vmax.f32 %v361, 0.0
  %v410 = vmax.f32 %v366, 0.0
  %v411 = vmax.f32 %v369, 0.0
  %v412 = vmax.f32 %v374, 0.0
  %v413 = vmax.f32 %v377, 0.0
  %v414 = vmax.f32 %v382, 0.0
  %v415 = vmax.f32 %v385, 0.0
  %v416 = vmax.f32 %v390, 0.0
  %v417 = vmax.f32 %v393, 0.0
  %v418 = vmax.f32 %v398, 0.0
  %v419 = vmax.f32 %v401, 0.0
  %v420 = vpack.c.bf16 %v405, %v404
  %v421 = vpack.c.bf16 %v407, %v406
  %v422 = vpack.c.bf16 %v409, %v408
  %v423 = vpack.c.bf16 %v411, %v410
  %v424 = vpack.c.bf16 %v413, %v412
  %v425 = vpack.c.bf16 %v415, %v414
  %v426 = vpack.c.bf16 %v417, %v416
  %v427 = vpack.c.bf16 %v419, %v418
  %v428 = vld [vmem:[%s5] sm:$0xf]
  %v429 = vld [vmem:[%s5 + $0x4] sm:$0xf]
  %v430 = vld [vmem:[%s5 + $0x8] sm:$0xf]
  %v431 = vld [vmem:[%s5 + $0xc] sm:$0xf]
  %v436 = vunpack.c.l.b16 %v428
  %v437 = vunpack.c.l.b16 %v429
  %v438 = vunpack.c.l.b16 %v430
  %v439 = vunpack.c.l.b16 %v431
  %v440 = vpack.c.b16 %v437, %v436
  %v441 = vpack.c.b16 %v439, %v438
  %vm444 = vcmask 261120
  %v446 = vsel %vm444, %v420, 0
  %v449 = vsel %vm444, %v421, 0
  %v452 = vsel %vm444, %v422, 0
  %v455 = vsel %vm444, %v423, 0
  %v458 = vsel %vm444, %v424, 0
  %v461 = vsel %vm444, %v425, 0
  %v464 = vsel %vm444, %v426, 0
  %v467 = vsel %vm444, %v427, 0
  %469 = vmatprep.subr.bf16.mxu0 0
  %470 = vmatpush1.bf16.msra.mxu0 0
  %471 = vmatprep.subr.bf16.mxu0 0
  %472 = vmatpush1.bf16.msra.mxu0 0
  %473 = vmatprep.subr.bf16.mxu0 0
  %474 = vmatpush1.bf16.msra.mxu0 0
  %475 = vmatprep.subr.bf16.mxu0 0
  %476 = vmatpush1.bf16.msra.mxu0 0
  %477 = vmatprep.subr.bf16.mxu0 0
  %478 = vmatpush1.bf16.msra.mxu0 0
  %479 = vmatprep.subr.bf16.mxu0 0
  %480 = vmatpush1.bf16.msra.mxu0 0
  %481 = vmatprep.subr.bf16.mxu0 0
  %482 = vmatpush1.bf16.msra.mxu0 %v441
  %483 = vmatprep.subr.bf16.mxu0 0
  %484 = vmatpush1.bf16.msra.mxu0 %v440
  %485 = vmatprep.subr.bf16.mxu0 0
  %486 = vmatpush2.bf16.msra.mxu0 0
  %487 = vmatprep.subr.bf16.mxu0 0
  %488 = vmatpush2.bf16.msra.mxu0 0
  %489 = vmatprep.subr.bf16.mxu0 0
  %490 = vmatpush2.bf16.msra.mxu0 0
  %491 = vmatprep.subr.bf16.mxu0 0
  %492 = vmatpush2.bf16.msra.mxu0 0
  %493 = vmatprep.subr.bf16.mxu0 0
  %494 = vmatpush2.bf16.msra.mxu0 0
  %495 = vmatprep.subr.bf16.mxu0 0
  %496 = vmatpush2.bf16.msra.mxu0 0
  %497 = vmatprep.subr.bf16.mxu0 0
  %498 = vmatpush2.bf16.msra.mxu0 0
  %499 = vmatprep.subr.bf16.mxu0 0
  %500 = vmatpush2.bf16.msra.mxu0 0
  %501 = vmatprep.mubr.bf16.mxu0 0
  %502 = vmatmul.mubr.bf16.gmra.mxu0 %v446
  %v503 = vpop.f32.mrf.mxu0
  %v504 = vadd.f32 0.0, %v503
  %v505 = vpop.f32.mrf.mxu0
  %v506 = vpop.f32.mrf.mxu0
  %v507 = vadd.f32 0.0, %v506
  %v508 = vpop.f32.mrf.mxu0
  %509 = vmatprep.mubr.bf16.mxu0 0
  %510 = vmatmul.mubr.bf16.gmra.mxu0 %v449
  %v511 = vpop.f32.mrf.mxu0
  %v512 = vadd.f32 0.0, %v511
  %v513 = vpop.f32.mrf.mxu0
  %v514 = vpop.f32.mrf.mxu0
  %v515 = vadd.f32 0.0, %v514
  %v516 = vpop.f32.mrf.mxu0
  %517 = vmatprep.mubr.bf16.mxu0 0
  %518 = vmatmul.mubr.bf16.gmra.mxu0 %v452
  %v519 = vpop.f32.mrf.mxu0
  %v520 = vadd.f32 0.0, %v519
  %v521 = vpop.f32.mrf.mxu0
  %v522 = vpop.f32.mrf.mxu0
  %v523 = vadd.f32 0.0, %v522
  %v524 = vpop.f32.mrf.mxu0
  %525 = vmatprep.mubr.bf16.mxu0 0
  %526 = vmatmul.mubr.bf16.gmra.mxu0 %v455
  %v527 = vpop.f32.mrf.mxu0
  %v528 = vadd.f32 0.0, %v527
  %v529 = vpop.f32.mrf.mxu0
  %v530 = vpop.f32.mrf.mxu0
  %v531 = vadd.f32 0.0, %v530
  %v532 = vpop.f32.mrf.mxu0
  %533 = vmatprep.mubr.bf16.mxu0 0
  %534 = vmatmul.mubr.bf16.gmra.mxu0 %v458
  %v535 = vpop.f32.mrf.mxu0
  %v536 = vadd.f32 0.0, %v535
  %v537 = vpop.f32.mrf.mxu0
  %v538 = vpop.f32.mrf.mxu0
  %v539 = vadd.f32 0.0, %v538
  %v540 = vpop.f32.mrf.mxu0
  %541 = vmatprep.mubr.bf16.mxu0 0
  %542 = vmatmul.mubr.bf16.gmra.mxu0 %v461
  %v543 = vpop.f32.mrf.mxu0
  %v544 = vadd.f32 0.0, %v543
  %v545 = vpop.f32.mrf.mxu0
  %v546 = vpop.f32.mrf.mxu0
  %v547 = vadd.f32 0.0, %v546
  %v548 = vpop.f32.mrf.mxu0
  %549 = vmatprep.mubr.bf16.mxu0 0
  %550 = vmatmul.mubr.bf16.gmra.mxu0 %v464
  %v551 = vpop.f32.mrf.mxu0
  %v552 = vadd.f32 0.0, %v551
  %v553 = vpop.f32.mrf.mxu0
  %v554 = vpop.f32.mrf.mxu0
  %v555 = vadd.f32 0.0, %v554
  %v556 = vpop.f32.mrf.mxu0
  %557 = vmatprep.mubr.bf16.mxu0 0
  %558 = vmatmul.mubr.bf16.gmra.mxu0 %v467
  %v559 = vpop.f32.mrf.mxu0
  %v560 = vadd.f32 0.0, %v559
  %v561 = vpop.f32.mrf.mxu0
  %v562 = vpop.f32.mrf.mxu0
  %v563 = vadd.f32 0.0, %v562
  %v564 = vpop.f32.mrf.mxu0
  %565 = vdwg.mxu0
  %v566 = vpack.c.bf16 %v507, %v504
  %v567 = vpack.c.bf16 %v515, %v512
  %v568 = vpack.c.bf16 %v523, %v520
  %v569 = vpack.c.bf16 %v531, %v528
  %v570 = vpack.c.bf16 %v539, %v536
  %v571 = vpack.c.bf16 %v547, %v544
  %v572 = vpack.c.bf16 %v555, %v552
  %v573 = vpack.c.bf16 %v563, %v560
  %v574 = vld [vmem:[%s6] sm:$0x1]
  %v576 = vlaneseq
  %v577 = vshrl.u32 %v576, 7
  %v578 = vsub.s32 0, %v577
  %v579 = vrot.slane %v574, %v578
  %581 = vmatprep.subr.bf16.mxu0 0
  %582 = vmatpush1.bf16.msra.mxu0 %v573
  %583 = vmatprep.subr.bf16.mxu0 0
  %584 = vmatpush1.bf16.msra.mxu0 %v572
  %585 = vmatprep.subr.bf16.mxu0 0
  %586 = vmatpush1.bf16.msra.mxu0 %v571
  %587 = vmatprep.subr.bf16.mxu0 0
  %588 = vmatpush1.bf16.msra.mxu0 %v570
  %589 = vmatprep.subr.bf16.mxu0 0
  %590 = vmatpush1.bf16.msra.mxu0 %v569
  %591 = vmatprep.subr.bf16.mxu0 0
  %592 = vmatpush1.bf16.msra.mxu0 %v568
  %593 = vmatprep.subr.bf16.mxu0 0
  %594 = vmatpush1.bf16.msra.mxu0 %v567
  %595 = vmatprep.subr.bf16.mxu0 0
  %596 = vmatpush1.bf16.msra.mxu0 %v566
  %597 = vmatprep.subr.bf16.mxu0 0
  %598 = vmatpush2.bf16.msra.mxu0 0
  %599 = vmatprep.subr.bf16.mxu0 0
  %600 = vmatpush2.bf16.msra.mxu0 0
  %601 = vmatprep.subr.bf16.mxu0 0
  %602 = vmatpush2.bf16.msra.mxu0 0
  %603 = vmatprep.subr.bf16.mxu0 0
  %604 = vmatpush2.bf16.msra.mxu0 0
  %605 = vmatprep.subr.bf16.mxu0 0
  %606 = vmatpush2.bf16.msra.mxu0 0
  %607 = vmatprep.subr.bf16.mxu0 0
  %608 = vmatpush2.bf16.msra.mxu0 0
  %609 = vmatprep.subr.bf16.mxu0 0
  %610 = vmatpush2.bf16.msra.mxu0 0
  %611 = vmatprep.subr.bf16.mxu0 0
  %612 = vmatpush2.bf16.msra.mxu0 0
  %613 = vmatprep.mubr.bf16.mxu0 0
  %614 = vmatmul.mubr.bf16.gmra.mxu0 %v291
  %v615 = vpop.f32.mrf.mxu0
  %v616 = vadd.f32 %v579, %v615
  %v617 = vpop.f32.mrf.mxu0
  %v618 = vpop.f32.mrf.mxu0
  %v619 = vadd.f32 %v579, %v618
  %v620 = vpop.f32.mrf.mxu0
  %621 = vmatprep.mubr.bf16.mxu0 0
  %622 = vmatmul.mubr.bf16.gmra.mxu0 %v292
  %v623 = vpop.f32.mrf.mxu0
  %v624 = vadd.f32 %v579, %v623
  %v625 = vpop.f32.mrf.mxu0
  %v626 = vpop.f32.mrf.mxu0
  %v627 = vadd.f32 %v579, %v626
  %v628 = vpop.f32.mrf.mxu0
  %629 = vmatprep.mubr.bf16.mxu0 0
  %630 = vmatmul.mubr.bf16.gmra.mxu0 %v293
  %v631 = vpop.f32.mrf.mxu0
  %v632 = vadd.f32 %v579, %v631
  %v633 = vpop.f32.mrf.mxu0
  %v634 = vpop.f32.mrf.mxu0
  %v635 = vadd.f32 %v579, %v634
  %v636 = vpop.f32.mrf.mxu0
  %637 = vmatprep.mubr.bf16.mxu0 0
  %638 = vmatmul.mubr.bf16.gmra.mxu0 %v294
  %v639 = vpop.f32.mrf.mxu0
  %v640 = vadd.f32 %v579, %v639
  %v641 = vpop.f32.mrf.mxu0
  %v642 = vpop.f32.mrf.mxu0
  %v643 = vadd.f32 %v579, %v642
  %v644 = vpop.f32.mrf.mxu0
  %645 = vmatprep.mubr.bf16.mxu0 0
  %646 = vmatmul.mubr.bf16.gmra.mxu0 %v295
  %v647 = vpop.f32.mrf.mxu0
  %v648 = vadd.f32 %v579, %v647
  %v649 = vpop.f32.mrf.mxu0
  %v650 = vpop.f32.mrf.mxu0
  %v651 = vadd.f32 %v579, %v650
  %v652 = vpop.f32.mrf.mxu0
  %653 = vmatprep.mubr.bf16.mxu0 0
  %654 = vmatmul.mubr.bf16.gmra.mxu0 %v296
  %v655 = vpop.f32.mrf.mxu0
  %v656 = vadd.f32 %v579, %v655
  %v657 = vpop.f32.mrf.mxu0
  %v658 = vpop.f32.mrf.mxu0
  %v659 = vadd.f32 %v579, %v658
  %v660 = vpop.f32.mrf.mxu0
  %661 = vmatprep.mubr.bf16.mxu0 0
  %662 = vmatmul.mubr.bf16.gmra.mxu0 %v297
  %v663 = vpop.f32.mrf.mxu0
  %v664 = vadd.f32 %v579, %v663
  %v665 = vpop.f32.mrf.mxu0
  %v666 = vpop.f32.mrf.mxu0
  %v667 = vadd.f32 %v579, %v666
  %v668 = vpop.f32.mrf.mxu0
  %669 = vmatprep.mubr.bf16.mxu0 0
  %670 = vmatmul.mubr.bf16.gmra.mxu0 %v298
  %v671 = vpop.f32.mrf.mxu0
  %v672 = vadd.f32 %v579, %v671
  %v673 = vpop.f32.mrf.mxu0
  %v674 = vpop.f32.mrf.mxu0
  %v675 = vadd.f32 %v579, %v674
  %v676 = vpop.f32.mrf.mxu0
  %677 = vdwg.mxu0
  %v678 = vmax.f32 %v616, 0.0
  %v679 = vmax.f32 %v619, 0.0
  %v680 = vmax.f32 %v624, 0.0
  %v681 = vmax.f32 %v627, 0.0
  %v682 = vmax.f32 %v632, 0.0
  %v683 = vmax.f32 %v635, 0.0
  %v684 = vmax.f32 %v640, 0.0
  %v685 = vmax.f32 %v643, 0.0
  %v686 = vmax.f32 %v648, 0.0
  %v687 = vmax.f32 %v651, 0.0
  %v688 = vmax.f32 %v656, 0.0
  %v689 = vmax.f32 %v659, 0.0
  %v690 = vmax.f32 %v664, 0.0
  %v691 = vmax.f32 %v667, 0.0
  %v692 = vmax.f32 %v672, 0.0
  %v693 = vmax.f32 %v675, 0.0
  %v694 = vpack.c.bf16 %v679, %v678
  %v695 = vpack.c.bf16 %v681, %v680
  %v696 = vpack.c.bf16 %v683, %v682
  %v697 = vpack.c.bf16 %v685, %v684
  %v698 = vpack.c.bf16 %v687, %v686
  %v699 = vpack.c.bf16 %v689, %v688
  %v700 = vpack.c.bf16 %v691, %v690
  %v701 = vpack.c.bf16 %v693, %v692
  %v702 = vld [vmem:[%s7] sm:$0xf]
  %v703 = vld [vmem:[%s7 + $0x4] sm:$0xf]
  %v704 = vld [vmem:[%s7 + $0x8] sm:$0xf]
  %v705 = vld [vmem:[%s7 + $0xc] sm:$0xf]
  %v710 = vunpack.c.l.b16 %v702
  %v711 = vunpack.c.l.b16 %v703
  %v712 = vunpack.c.l.b16 %v704
  %v713 = vunpack.c.l.b16 %v705
  %v714 = vpack.c.b16 %v711, %v710
  %v715 = vpack.c.b16 %v713, %v712
  %v719 = vsel %vm444, %v694, 0
  %v722 = vsel %vm444, %v695, 0
  %v725 = vsel %vm444, %v696, 0
  %v728 = vsel %vm444, %v697, 0
  %v731 = vsel %vm444, %v698, 0
  %v734 = vsel %vm444, %v699, 0
  %v737 = vsel %vm444, %v700, 0
  %v740 = vsel %vm444, %v701, 0
  %742 = vmatprep.subr.bf16.mxu0 0
  %743 = vmatpush1.bf16.msra.mxu0 0
  %744 = vmatprep.subr.bf16.mxu0 0
  %745 = vmatpush1.bf16.msra.mxu0 0
  %746 = vmatprep.subr.bf16.mxu0 0
  %747 = vmatpush1.bf16.msra.mxu0 0
  %748 = vmatprep.subr.bf16.mxu0 0
  %749 = vmatpush1.bf16.msra.mxu0 0
  %750 = vmatprep.subr.bf16.mxu0 0
  %751 = vmatpush1.bf16.msra.mxu0 0
  %752 = vmatprep.subr.bf16.mxu0 0
  %753 = vmatpush1.bf16.msra.mxu0 0
  %754 = vmatprep.subr.bf16.mxu0 0
  %755 = vmatpush1.bf16.msra.mxu0 %v715
  %756 = vmatprep.subr.bf16.mxu0 0
  %757 = vmatpush1.bf16.msra.mxu0 %v714
  %758 = vmatprep.subr.bf16.mxu0 0
  %759 = vmatpush2.bf16.msra.mxu0 0
  %760 = vmatprep.subr.bf16.mxu0 0
  %761 = vmatpush2.bf16.msra.mxu0 0
  %762 = vmatprep.subr.bf16.mxu0 0
  %763 = vmatpush2.bf16.msra.mxu0 0
  %764 = vmatprep.subr.bf16.mxu0 0
  %765 = vmatpush2.bf16.msra.mxu0 0
  %766 = vmatprep.subr.bf16.mxu0 0
  %767 = vmatpush2.bf16.msra.mxu0 0
  %768 = vmatprep.subr.bf16.mxu0 0
  %769 = vmatpush2.bf16.msra.mxu0 0
  %770 = vmatprep.subr.bf16.mxu0 0
  %771 = vmatpush2.bf16.msra.mxu0 0
  %772 = vmatprep.subr.bf16.mxu0 0
  %773 = vmatpush2.bf16.msra.mxu0 0
  %774 = vmatprep.mubr.bf16.mxu0 0
  %775 = vmatmul.mubr.bf16.gmra.mxu0 %v719
  %v776 = vpop.f32.mrf.mxu0
  %v777 = vadd.f32 0.0, %v776
  %v778 = vpop.f32.mrf.mxu0
  %v779 = vpop.f32.mrf.mxu0
  %v780 = vadd.f32 0.0, %v779
  %v781 = vpop.f32.mrf.mxu0
  %782 = vmatprep.mubr.bf16.mxu0 0
  %783 = vmatmul.mubr.bf16.gmra.mxu0 %v722
  %v784 = vpop.f32.mrf.mxu0
  %v785 = vadd.f32 0.0, %v784
  %v786 = vpop.f32.mrf.mxu0
  %v787 = vpop.f32.mrf.mxu0
  %v788 = vadd.f32 0.0, %v787
  %v789 = vpop.f32.mrf.mxu0
  %790 = vmatprep.mubr.bf16.mxu0 0
  %791 = vmatmul.mubr.bf16.gmra.mxu0 %v725
  %v792 = vpop.f32.mrf.mxu0
  %v793 = vadd.f32 0.0, %v792
  %v794 = vpop.f32.mrf.mxu0
  %v795 = vpop.f32.mrf.mxu0
  %v796 = vadd.f32 0.0, %v795
  %v797 = vpop.f32.mrf.mxu0
  %798 = vmatprep.mubr.bf16.mxu0 0
  %799 = vmatmul.mubr.bf16.gmra.mxu0 %v728
  %v800 = vpop.f32.mrf.mxu0
  %v801 = vadd.f32 0.0, %v800
  %v802 = vpop.f32.mrf.mxu0
  %v803 = vpop.f32.mrf.mxu0
  %v804 = vadd.f32 0.0, %v803
  %v805 = vpop.f32.mrf.mxu0
  %806 = vmatprep.mubr.bf16.mxu0 0
  %807 = vmatmul.mubr.bf16.gmra.mxu0 %v731
  %v808 = vpop.f32.mrf.mxu0
  %v809 = vadd.f32 0.0, %v808
  %v810 = vpop.f32.mrf.mxu0
  %v811 = vpop.f32.mrf.mxu0
  %v812 = vadd.f32 0.0, %v811
  %v813 = vpop.f32.mrf.mxu0
  %814 = vmatprep.mubr.bf16.mxu0 0
  %815 = vmatmul.mubr.bf16.gmra.mxu0 %v734
  %v816 = vpop.f32.mrf.mxu0
  %v817 = vadd.f32 0.0, %v816
  %v818 = vpop.f32.mrf.mxu0
  %v819 = vpop.f32.mrf.mxu0
  %v820 = vadd.f32 0.0, %v819
  %v821 = vpop.f32.mrf.mxu0
  %822 = vmatprep.mubr.bf16.mxu0 0
  %823 = vmatmul.mubr.bf16.gmra.mxu0 %v737
  %v824 = vpop.f32.mrf.mxu0
  %v825 = vadd.f32 0.0, %v824
  %v826 = vpop.f32.mrf.mxu0
  %v827 = vpop.f32.mrf.mxu0
  %v828 = vadd.f32 0.0, %v827
  %v829 = vpop.f32.mrf.mxu0
  %830 = vmatprep.mubr.bf16.mxu0 0
  %831 = vmatmul.mubr.bf16.gmra.mxu0 %v740
  %v832 = vpop.f32.mrf.mxu0
  %v833 = vadd.f32 0.0, %v832
  %v834 = vpop.f32.mrf.mxu0
  %v835 = vpop.f32.mrf.mxu0
  %v836 = vadd.f32 0.0, %v835
  %v837 = vpop.f32.mrf.mxu0
  %838 = vdwg.mxu0
  %v839 = vpack.c.bf16 %v780, %v777
  %v840 = vpack.c.bf16 %v788, %v785
  %v841 = vpack.c.bf16 %v796, %v793
  %v842 = vpack.c.bf16 %v804, %v801
  %v843 = vpack.c.bf16 %v812, %v809
  %v844 = vpack.c.bf16 %v820, %v817
  %v845 = vpack.c.bf16 %v828, %v825
  %v846 = vpack.c.bf16 %v836, %v833
  %v847 = vld [vmem:[%s8] sm:$0x1]
  %v849 = vlaneseq
  %v850 = vshrl.u32 %v849, 7
  %v851 = vsub.s32 0, %v850
  %v852 = vrot.slane %v847, %v851
  %854 = vmatprep.subr.bf16.mxu0 0
  %855 = vmatpush1.bf16.msra.mxu0 %v846
  %856 = vmatprep.subr.bf16.mxu0 0
  %857 = vmatpush1.bf16.msra.mxu0 %v845
  %858 = vmatprep.subr.bf16.mxu0 0
  %859 = vmatpush1.bf16.msra.mxu0 %v844
  %860 = vmatprep.subr.bf16.mxu0 0
  %861 = vmatpush1.bf16.msra.mxu0 %v843
  %862 = vmatprep.subr.bf16.mxu0 0
  %863 = vmatpush1.bf16.msra.mxu0 %v842
  %864 = vmatprep.subr.bf16.mxu0 0
  %865 = vmatpush1.bf16.msra.mxu0 %v841
  %866 = vmatprep.subr.bf16.mxu0 0
  %867 = vmatpush1.bf16.msra.mxu0 %v840
  %868 = vmatprep.subr.bf16.mxu0 0
  %869 = vmatpush1.bf16.msra.mxu0 %v839
  %870 = vmatprep.subr.bf16.mxu0 0
  %871 = vmatpush2.bf16.msra.mxu0 0
  %872 = vmatprep.subr.bf16.mxu0 0
  %873 = vmatpush2.bf16.msra.mxu0 0
  %874 = vmatprep.subr.bf16.mxu0 0
  %875 = vmatpush2.bf16.msra.mxu0 0
  %876 = vmatprep.subr.bf16.mxu0 0
  %877 = vmatpush2.bf16.msra.mxu0 0
  %878 = vmatprep.subr.bf16.mxu0 0
  %879 = vmatpush2.bf16.msra.mxu0 0
  %880 = vmatprep.subr.bf16.mxu0 0
  %881 = vmatpush2.bf16.msra.mxu0 0
  %882 = vmatprep.subr.bf16.mxu0 0
  %883 = vmatpush2.bf16.msra.mxu0 0
  %884 = vmatprep.subr.bf16.mxu0 0
  %885 = vmatpush2.bf16.msra.mxu0 0
  %886 = vmatprep.mubr.bf16.mxu0 0
  %887 = vmatmul.mubr.bf16.gmra.mxu0 %v291
  %v888 = vpop.f32.mrf.mxu0
  %v889 = vadd.f32 %v852, %v888
  %v890 = vpop.f32.mrf.mxu0
  %v891 = vpop.f32.mrf.mxu0
  %v892 = vadd.f32 %v852, %v891
  %v893 = vpop.f32.mrf.mxu0
  %894 = vmatprep.mubr.bf16.mxu0 0
  %895 = vmatmul.mubr.bf16.gmra.mxu0 %v292
  %v896 = vpop.f32.mrf.mxu0
  %v897 = vadd.f32 %v852, %v896
  %v898 = vpop.f32.mrf.mxu0
  %v899 = vpop.f32.mrf.mxu0
  %v900 = vadd.f32 %v852, %v899
  %v901 = vpop.f32.mrf.mxu0
  %902 = vmatprep.mubr.bf16.mxu0 0
  %903 = vmatmul.mubr.bf16.gmra.mxu0 %v293
  %v904 = vpop.f32.mrf.mxu0
  %v905 = vadd.f32 %v852, %v904
  %v906 = vpop.f32.mrf.mxu0
  %v907 = vpop.f32.mrf.mxu0
  %v908 = vadd.f32 %v852, %v907
  %v909 = vpop.f32.mrf.mxu0
  %910 = vmatprep.mubr.bf16.mxu0 0
  %911 = vmatmul.mubr.bf16.gmra.mxu0 %v294
  %v912 = vpop.f32.mrf.mxu0
  %v913 = vadd.f32 %v852, %v912
  %v914 = vpop.f32.mrf.mxu0
  %v915 = vpop.f32.mrf.mxu0
  %v916 = vadd.f32 %v852, %v915
  %v917 = vpop.f32.mrf.mxu0
  %918 = vmatprep.mubr.bf16.mxu0 0
  %919 = vmatmul.mubr.bf16.gmra.mxu0 %v295
  %v920 = vpop.f32.mrf.mxu0
  %v921 = vadd.f32 %v852, %v920
  %v922 = vpop.f32.mrf.mxu0
  %v923 = vpop.f32.mrf.mxu0
  %v924 = vadd.f32 %v852, %v923
  %v925 = vpop.f32.mrf.mxu0
  %926 = vmatprep.mubr.bf16.mxu0 0
  %927 = vmatmul.mubr.bf16.gmra.mxu0 %v296
  %v928 = vpop.f32.mrf.mxu0
  %v929 = vadd.f32 %v852, %v928
  %v930 = vpop.f32.mrf.mxu0
  %v931 = vpop.f32.mrf.mxu0
  %v932 = vadd.f32 %v852, %v931
  %v933 = vpop.f32.mrf.mxu0
  %934 = vmatprep.mubr.bf16.mxu0 0
  %935 = vmatmul.mubr.bf16.gmra.mxu0 %v297
  %v936 = vpop.f32.mrf.mxu0
  %v937 = vadd.f32 %v852, %v936
  %v938 = vpop.f32.mrf.mxu0
  %v939 = vpop.f32.mrf.mxu0
  %v940 = vadd.f32 %v852, %v939
  %v941 = vpop.f32.mrf.mxu0
  %942 = vmatprep.mubr.bf16.mxu0 0
  %943 = vmatmul.mubr.bf16.gmra.mxu0 %v298
  %v944 = vpop.f32.mrf.mxu0
  %v945 = vadd.f32 %v852, %v944
  %v946 = vpop.f32.mrf.mxu0
  %v947 = vpop.f32.mrf.mxu0
  %v948 = vadd.f32 %v852, %v947
  %v949 = vpop.f32.mrf.mxu0
  %950 = vdwg.mxu0
  %v951 = vmax.f32 %v889, 0.0
  %v952 = vmax.f32 %v892, 0.0
  %v953 = vmax.f32 %v897, 0.0
  %v954 = vmax.f32 %v900, 0.0
  %v955 = vmax.f32 %v905, 0.0
  %v956 = vmax.f32 %v908, 0.0
  %v957 = vmax.f32 %v913, 0.0
  %v958 = vmax.f32 %v916, 0.0
  %v959 = vmax.f32 %v921, 0.0
  %v960 = vmax.f32 %v924, 0.0
  %v961 = vmax.f32 %v929, 0.0
  %v962 = vmax.f32 %v932, 0.0
  %v963 = vmax.f32 %v937, 0.0
  %v964 = vmax.f32 %v940, 0.0
  %v965 = vmax.f32 %v945, 0.0
  %v966 = vmax.f32 %v948, 0.0
  %v967 = vpack.c.bf16 %v952, %v951
  %v968 = vpack.c.bf16 %v954, %v953
  %v969 = vpack.c.bf16 %v956, %v955
  %v970 = vpack.c.bf16 %v958, %v957
  %v971 = vpack.c.bf16 %v960, %v959
  %v972 = vpack.c.bf16 %v962, %v961
  %v973 = vpack.c.bf16 %v964, %v963
  %v974 = vpack.c.bf16 %v966, %v965
  %v975 = vld [vmem:[%s1] sm:$0xf]
  %v976 = vld [vmem:[%s1 + $0x4] sm:$0xf]
  %v979 = vunpack.c.l.b16 %v975
  %v980 = vunpack.c.l.b16 %v976
  %v981 = vpack.c.b16 %v980, %v979
  %983 = vmatprep.subr.bf16.mxu0 0
  %984 = vmatpush1.bf16.msra.mxu0 %v974
  %985 = vmatprep.subr.bf16.mxu0 0
  %986 = vmatpush1.bf16.msra.mxu0 %v973
  %987 = vmatprep.subr.bf16.mxu0 0
  %988 = vmatpush1.bf16.msra.mxu0 %v972
  %989 = vmatprep.subr.bf16.mxu0 0
  %990 = vmatpush1.bf16.msra.mxu0 %v971
  %991 = vmatprep.subr.bf16.mxu0 0
  %992 = vmatpush1.bf16.msra.mxu0 %v970
  %993 = vmatprep.subr.bf16.mxu0 0
  %994 = vmatpush1.bf16.msra.mxu0 %v969
  %995 = vmatprep.subr.bf16.mxu0 0
  %996 = vmatpush1.bf16.msra.mxu0 %v968
  %997 = vmatprep.subr.bf16.mxu0 0
  %998 = vmatpush1.bf16.msra.mxu0 %v967
  %999 = vmatprep.subr.bf16.mxu0 0
  %1000 = vmatpush2.bf16.msra.mxu0 0
  %1001 = vmatprep.subr.bf16.mxu0 0
  %1002 = vmatpush2.bf16.msra.mxu0 0
  %1003 = vmatprep.subr.bf16.mxu0 0
  %1004 = vmatpush2.bf16.msra.mxu0 0
  %1005 = vmatprep.subr.bf16.mxu0 0
  %1006 = vmatpush2.bf16.msra.mxu0 0
  %1007 = vmatprep.subr.bf16.mxu0 0
  %1008 = vmatpush2.bf16.msra.mxu0 0
  %1009 = vmatprep.subr.bf16.mxu0 0
  %1010 = vmatpush2.bf16.msra.mxu0 0
  %1011 = vmatprep.subr.bf16.mxu0 0
  %1012 = vmatpush2.bf16.msra.mxu0 0
  %1013 = vmatprep.subr.bf16.mxu0 0
  %1014 = vmatpush2.bf16.msra.mxu0 0
  %1015 = vmatprep.mubr.bf16.mxu0 0
  %1016 = vmatmul.mubr.bf16.gmra.mxu0 %v981
  %v1017 = vpop.f32.mrf.mxu0
  %v1018 = vadd.f32 0.0, %v1017
  %v1019 = vpop.f32.mrf.mxu0
  %v1020 = vpop.f32.mrf.mxu0
  %v1021 = vadd.f32 0.0, %v1020
  %v1022 = vpop.f32.mrf.mxu0
  %1023 = vdwg.mxu0
  %v1024 = vpack.c.bf16 %v1021, %v1018
  %v1025 = vld [vmem:[%s9] sm:$0xf]
  %v1026 = vld [vmem:[%s9 + $0x4] sm:$0xf]
  %v1027 = vld [vmem:[%s9 + $0x8] sm:$0xf]
  %v1028 = vld [vmem:[%s9 + $0xc] sm:$0xf]
  %v1029 = vld [vmem:[%s10] sm:$0x1]
  %v1031 = vlaneseq
  %v1032 = vshrl.u32 %v1031, 7
  %v1033 = vsub.s32 0, %v1032
  %v1034 = vrot.slane %v1029, %v1033
  %v1040 = vunpack.c.l.b16 %v1025
  %v1041 = vunpack.c.l.b16 %v1026
  %v1042 = vunpack.c.l.b16 %v1027
  %v1043 = vunpack.c.l.b16 %v1028
  %v1044 = vpack.c.b16 %v1041, %v1040
  %v1045 = vpack.c.b16 %v1043, %v1042
  %v1049 = vsel %vm444, %v1024, 0
  %1051 = vmatprep.subr.bf16.mxu0 0
  %1052 = vmatpush1.bf16.msra.mxu0 0
  %1053 = vmatprep.subr.bf16.mxu0 0
  %1054 = vmatpush1.bf16.msra.mxu0 0
  %1055 = vmatprep.subr.bf16.mxu0 0
  %1056 = vmatpush1.bf16.msra.mxu0 0
  %1057 = vmatprep.subr.bf16.mxu0 0
  %1058 = vmatpush1.bf16.msra.mxu0 0
  %1059 = vmatprep.subr.bf16.mxu0 0
  %1060 = vmatpush1.bf16.msra.mxu0 0
  %1061 = vmatprep.subr.bf16.mxu0 0
  %1062 = vmatpush1.bf16.msra.mxu0 0
  %1063 = vmatprep.subr.bf16.mxu0 0
  %1064 = vmatpush1.bf16.msra.mxu0 %v1045
  %1065 = vmatprep.subr.bf16.mxu0 0
  %1066 = vmatpush1.bf16.msra.mxu0 %v1044
  %1067 = vmatprep.subr.bf16.mxu0 0
  %1068 = vmatpush2.bf16.msra.mxu0 0
  %1069 = vmatprep.subr.bf16.mxu0 0
  %1070 = vmatpush2.bf16.msra.mxu0 0
  %1071 = vmatprep.subr.bf16.mxu0 0
  %1072 = vmatpush2.bf16.msra.mxu0 0
  %1073 = vmatprep.subr.bf16.mxu0 0
  %1074 = vmatpush2.bf16.msra.mxu0 0
  %1075 = vmatprep.subr.bf16.mxu0 0
  %1076 = vmatpush2.bf16.msra.mxu0 0
  %1077 = vmatprep.subr.bf16.mxu0 0
  %1078 = vmatpush2.bf16.msra.mxu0 0
  %1079 = vmatprep.subr.bf16.mxu0 0
  %1080 = vmatpush2.bf16.msra.mxu0 0
  %1081 = vmatprep.subr.bf16.mxu0 0
  %1082 = vmatpush2.bf16.msra.mxu0 0
  %1083 = vmatprep.mubr.bf16.mxu0 0
  %1084 = vmatmul.mubr.bf16.gmra.mxu0 %v1049
  %v1085 = vpop.f32.mrf.mxu0
  %v1086 = vadd.f32 %v1034, %v1085
  %v1087 = vpop.f32.mrf.mxu0
  %v1088 = vpop.f32.mrf.mxu0
  %v1089 = vadd.f32 %v1034, %v1088
  %v1090 = vpop.f32.mrf.mxu0
  %1091 = vdwg.mxu0
  %v1092 = vmax.f32 %v1086, 0.0
  %v1093 = vmax.f32 %v1089, 0.0
  %v1094 = vpack.c.bf16 %v1093, %v1092
  %v1095 = vld [vmem:[%s11] sm:$0xf]
  %v1096 = vld [vmem:[%s11 + $0x4] sm:$0xf]
  %v1097 = vld [vmem:[%s11 + $0x8] sm:$0xf]
  %v1098 = vld [vmem:[%s11 + $0xc] sm:$0xf]
  %v1099 = vld [vmem:[%s12] sm:$0x1]
  %v1101 = vlaneseq
  %v1102 = vshrl.u32 %v1101, 7
  %v1103 = vsub.s32 0, %v1102
  %v1104 = vrot.slane %v1099, %v1103
  %v1110 = vunpack.c.l.b16 %v1095
  %v1111 = vunpack.c.l.b16 %v1096
  %v1112 = vunpack.c.l.b16 %v1097
  %v1113 = vunpack.c.l.b16 %v1098
  %v1114 = vpack.c.b16 %v1111, %v1110
  %v1115 = vpack.c.b16 %v1113, %v1112
  %v1119 = vsel %vm444, %v1094, 0
  %1121 = vmatprep.subr.bf16.mxu0 0
  %1122 = vmatpush1.bf16.msra.mxu0 0
  %1123 = vmatprep.subr.bf16.mxu0 0
  %1124 = vmatpush1.bf16.msra.mxu0 0
  %1125 = vmatprep.subr.bf16.mxu0 0
  %1126 = vmatpush1.bf16.msra.mxu0 0
  %1127 = vmatprep.subr.bf16.mxu0 0
  %1128 = vmatpush1.bf16.msra.mxu0 0
  %1129 = vmatprep.subr.bf16.mxu0 0
  %1130 = vmatpush1.bf16.msra.mxu0 0
  %1131 = vmatprep.subr.bf16.mxu0 0
  %1132 = vmatpush1.bf16.msra.mxu0 0
  %1133 = vmatprep.subr.bf16.mxu0 0
  %1134 = vmatpush1.bf16.msra.mxu0 %v1115
  %1135 = vmatprep.subr.bf16.mxu0 0
  %1136 = vmatpush1.bf16.msra.mxu0 %v1114
  %1137 = vmatprep.subr.bf16.mxu0 0
  %1138 = vmatpush2.bf16.msra.mxu0 0
  %1139 = vmatprep.subr.bf16.mxu0 0
  %1140 = vmatpush2.bf16.msra.mxu0 0
  %1141 = vmatprep.subr.bf16.mxu0 0
  %1142 = vmatpush2.bf16.msra.mxu0 0
  %1143 = vmatprep.subr.bf16.mxu0 0
  %1144 = vmatpush2.bf16.msra.mxu0 0
  %1145 = vmatprep.subr.bf16.mxu0 0
  %1146 = vmatpush2.bf16.msra.mxu0 0
  %1147 = vmatprep.subr.bf16.mxu0 0
  %1148 = vmatpush2.bf16.msra.mxu0 0
  %1149 = vmatprep.subr.bf16.mxu0 0
  %1150 = vmatpush2.bf16.msra.mxu0 0
  %1151 = vmatprep.subr.bf16.mxu0 0
  %1152 = vmatpush2.bf16.msra.mxu0 0
  %1153 = vmatprep.mubr.bf16.mxu0 0
  %1154 = vmatmul.mubr.bf16.gmra.mxu0 %v1119
  %v1155 = vpop.f32.mrf.mxu0
  %v1156 = vadd.f32 %v1104, %v1155
  %v1157 = vpop.f32.mrf.mxu0
  %v1158 = vpop.f32.mrf.mxu0
  %v1159 = vadd.f32 %v1104, %v1158
  %v1160 = vpop.f32.mrf.mxu0
  %1161 = vdwg.mxu0
  %1162 = vst [vmem:[%s13] sm:$0xff] %v1156
  %1163 = vst [vmem:[%s13 + $0x8] sm:$0xff] %v1159
  // Predicated region
  $region54: #{gripping_point_gnn.1} parent=0 // pred_check
    _
  $region55: #{gripping_point_gnn.1} parent=0 // pred_check_branch
    %1165 = sbr.rel (0) target = $region57
  $region56: #{gripping_point_gnn.1} parent=0 // pred_region
    _
  $region57: #{gripping_point_gnn.1} parent=0 // pred_fallthru
    _
  // Predicated region
  $region58: #{gripping_point_gnn.1} parent=0 // pred_check
    _
  $region59: #{gripping_point_gnn.1} parent=0 // pred_check_branch
    %1167 = sbr.rel (0) target = $region61
  $region60: #{gripping_point_gnn.1} parent=0 // pred_region
    _
  $region61: #{gripping_point_gnn.1} parent=0 // pred_fallthru
    _

</llo_original>
